<compile_context>
chip_gen: v7x
topology: tpu7x:2x2x1
jax: 0.10.0
libtpu: 0.0.40
codegen_flags: <defaults>
</compile_context>

<pallas_src>
import jax
import jax.numpy as jnp
import numpy as np
from jax.experimental import pallas as pl
from jax.experimental.pallas import tpu as pltpu


def _afd_kernel(x_ref, w_ref, o_ref):
    """Fused pool -> linear -> sigmoid -> channel gate for NB batch elements.

    x_ref : (NB, C, HWp)  input tile (channels on sublanes, spatial on lanes)
    w_ref : (C, C)        host-prepared (W / (H*W)).T  -- pool scale folded in
    o_ref : (NB, C, HWp)  output tile
    """
    # Global pooled sums over spatial (1/HW already folded into the weight).
    s = jnp.sum(x_ref[...].astype(jnp.float32), axis=2)              # (NB, C)

    # Batched gate linear + sigmoid (f32 accumulation, one MXU push per step).
    imp = jax.nn.sigmoid(
        jnp.dot(s, w_ref[...], preferred_element_type=jnp.float32))  # (NB, C)

    # Re-read x from VMEM for the gate (vld is cheap; avoids keeping the block
    # live in vregs across the pool + matmul -> no spills at large blocks).
    o_ref[...] = (x_ref[...].astype(jnp.float32)
                  * imp[:, :, None]).astype(o_ref.dtype)


def _build_call(n_steps, nb, C, HWp, out_dtype, single_buffer_weight):
    w_kwargs = {"pipeline_mode": pl.Buffered(1)} if single_buffer_weight else {}
    return pl.pallas_call(
        _afd_kernel,
        out_shape=jax.ShapeDtypeStruct((n_steps * nb, C, HWp), out_dtype),
        grid_spec=pltpu.PrefetchScalarGridSpec(
            num_scalar_prefetch=0,
            grid=(n_steps,),
            in_specs=[
                pl.BlockSpec((nb, C, HWp), lambda n: (n, 0, 0)),
                pl.BlockSpec((C, C), lambda n: (0, 0), **w_kwargs),
            ],
            out_specs=pl.BlockSpec((nb, C, HWp), lambda n: (n, 0, 0)),
        ),
        compiler_params=pltpu.CompilerParams(
            dimension_semantics=("parallel",)),
    )


def adaptive_feature_distillation(x_nchw, fc_weight):
    """x_nchw: (N, C, H, W); fc_weight: (C, C) PyTorch Linear weight (out, in)."""
    N, C, H, W = x_nchw.shape
    HW = H * W
    HWp = ((HW + 127) // 128) * 128                 # lane-dense spatial axis
    itemsize = jnp.dtype(x_nchw.dtype).itemsize

    x3 = x_nchw.reshape(N, C, HW)
    if HWp != HW:
        # Zero padding is safe: the kernel only sums over spatial and the
        # 1/HW divisor below uses the ORIGINAL HW.
        x3 = jnp.pad(x3, ((0, 0), (0, 0), (0, HWp - HW)))

    # Fold the global-average-pool divisor into the weight once; transpose so
    # the in-kernel matmul is (NB, C) @ (C, C) -> (NB, C) == sigmoid(g @ W^T).
    w_t = (fc_weight.astype(jnp.float32) / float(HW)).T

    # Batches per grid step: target ~1 MiB per x block (comfortable under the
    # default scoped VMEM limit on v5e/v6e/v7x with double buffering), NB | N,
    # and keep >= 2 grid steps when possible so both v7x TCs get work.
    bytes_per_batch = max(1, C * HWp * itemsize)
    nb_cap = max(1, (1 << 20) // bytes_per_batch)
    divisors = [d for d in range(1, N + 1) if N % d == 0]
    nb = max(d for d in divisors if d <= nb_cap)
    if N // nb < 2 and N >= 2:
        smaller = [d for d in divisors if N // d >= 2]
        if smaller:
            nb = max(smaller)
    n_steps = N // nb

    try:
        out3 = _build_call(n_steps, nb, C, HWp, x_nchw.dtype, True)(x3, w_t)
    except Exception:
        # Older/newer JAX may reject buffer_count=1; fall back to default
        # double-buffered weight (only costs VMEM, not correctness).
        out3 = _build_call(n_steps, nb, C, HWp, x_nchw.dtype, False)(x3, w_t)

    return out3[:, :, :HW].reshape(N, C, H, W)


if __name__ == "__main__":
    N, C, H, W = 2, 4, 16, 16

    k0, k1 = jax.random.split(jax.random.PRNGKey(0))
    x = jax.random.normal(k0, (N, C, H, W), jnp.float32)
    # nn.Linear(channels, channels, bias=False) weight: (out_features, in_features)
    fc_w = jax.random.normal(k1, (C, C), jnp.float32) * 0.5

    out = adaptive_feature_distillation(x, fc_w)
    out = jax.block_until_ready(out)

    # Pure-JAX reference with PyTorch semantics.
    g = jnp.mean(x, axis=(2, 3))                      # (N, C)
    imp = jax.nn.sigmoid(g @ fc_w.T)                  # (N, C)
    ref = x * imp[:, :, None, None]

    assert out.shape == (N, C, H, W)
    np.testing.assert_allclose(np.asarray(out), np.asarray(ref),
                               rtol=1e-3, atol=1e-4)
    print("KERNEL_OK")
</pallas_src>

<mosaic_0001>
module attributes {stable_mosaic.version = 11 : i64} {
  func.func @_afd_kernel(%arg0: i32, %arg1: memref<1x4x256xf32, #tpu.memory_space<vmem>>, %arg2: memref<4x4xf32, #tpu.memory_space<vmem>>, %arg3: memref<1x4x256xf32, #tpu.memory_space<vmem>>) attributes {dimension_semantics = [#tpu.dimension_semantics<parallel>], iteration_bounds = array<i64: 2>, scalar_prefetch = 0 : i64, scratch_operands = 0 : i64, tpu.core_type = #tpu.core_type<tc>, window_params = [{transform_indices = @transform_0, window_bounds = array<i64: 1, 4, 256>}, {pipeline_mode = #tpu.pipeline_mode<synchronous>, transform_indices = @transform_1, window_bounds = array<i64: 4, 4>}, {transform_indices = @transform_2, window_bounds = array<i64: 1, 4, 256>}]} {
    %c0 = arith.constant 0 : index
    %c0_0 = arith.constant 0 : index
    %c0_1 = arith.constant 0 : index
    %0 = vector.load %arg1[%c0, %c0_0, %c0_1] : memref<1x4x256xf32, #tpu.memory_space<vmem>>, vector<1x4x256xf32>
    %cst = arith.constant dense<0.000000e+00> : vector<1x4xf32>
    %1 = vector.multi_reduction <add>, %0, %cst [2] : vector<1x4x256xf32> to vector<1x4xf32>
    %c0_2 = arith.constant 0 : index
    %c0_3 = arith.constant 0 : index
    %2 = vector.load %arg2[%c0_2, %c0_3] : memref<4x4xf32, #tpu.memory_space<vmem>>, vector<4x4xf32>
    %cst_4 = arith.constant dense<0.000000e+00> : vector<1x4xf32>
    %3 = tpu.matmul %1, %2, %cst_4 {dimension_numbers = #tpu.dot_dimension_numbers<[1], [0], [0], [1], [0, 0, 1, 1], [], []>} : vector<1x4xf32>, vector<4x4xf32>, vector<1x4xf32> -> vector<1x4xf32>
    %4 = arith.negf %3 : vector<1x4xf32>
    %5 = math.exp %4 : vector<1x4xf32>
    %cst_5 = arith.constant 1.000000e+00 : f32
    %6 = vector.broadcast %cst_5 : f32 to vector<1x4xf32>
    %7 = arith.addf %6, %5 : vector<1x4xf32>
    %8 = arith.divf %6, %7 : vector<1x4xf32>
    %c0_6 = arith.constant 0 : index
    %c0_7 = arith.constant 0 : index
    %c0_8 = arith.constant 0 : index
    %9 = vector.load %arg1[%c0_6, %c0_7, %c0_8] : memref<1x4x256xf32, #tpu.memory_space<vmem>>, vector<1x4x256xf32>
    %10 = vector.shape_cast %8 : vector<1x4xf32> to vector<1x4x1xf32>
    %11 = vector.broadcast %10 : vector<1x4x1xf32> to vector<1x4x256xf32>
    %12 = arith.mulf %9, %11 : vector<1x4x256xf32>
    %c0_9 = arith.constant 0 : index
    %c0_10 = arith.constant 0 : index
    %c0_11 = arith.constant 0 : index
    %13 = vector.load %arg3[%c0_9, %c0_10, %c0_11] : memref<1x4x256xf32, #tpu.memory_space<vmem>>, vector<1x4x256xf32>
    tpu.vector_store %arg3[%c0_9, %c0_10, %c0_11], %12 {strides = array<i32>} : memref<1x4x256xf32, #tpu.memory_space<vmem>>, vector<1x4x256xf32>,
    return
  }
  func.func @transform_0(%arg0: i32) -> (i32, i32, i32) {
    %c0_i32 = arith.constant 0 : i32
    %c0_i32_0 = arith.constant 0 : i32
    %c0_i32_1 = arith.constant 0 : i32
    return %arg0, %c0_i32, %c0_i32_0 : i32, i32, i32
  }
  func.func @transform_1(%arg0: i32) -> (i32, i32) {
    %c0_i32 = arith.constant 0 : i32
    %c0_i32_0 = arith.constant 0 : i32
    %c0_i32_1 = arith.constant 0 : i32
    return %c0_i32, %c0_i32_0 : i32, i32
  }
  func.func @transform_2(%arg0: i32) -> (i32, i32, i32) {
    %c0_i32 = arith.constant 0 : i32
    %c0_i32_0 = arith.constant 0 : i32
    %c0_i32_1 = arith.constant 0 : i32
    return %arg0, %c0_i32, %c0_i32_0 : i32, i32, i32
  }
}

module attributes {stable_mosaic.version = 11 : i64} {
  func.func @_afd_kernel(%arg0: i32, %arg1: memref<1x4x256xf32, #tpu.memory_space<vmem>>, %arg2: memref<4x4xf32, #tpu.memory_space<vmem>>, %arg3: memref<1x4x256xf32, #tpu.memory_space<vmem>>) attributes {dimension_semantics = [#tpu.dimension_semantics<parallel>], iteration_bounds = array<i64: 2>, scalar_prefetch = 0 : i64, scratch_operands = 0 : i64, tpu.core_type = #tpu.core_type<tc>, window_params = [{transform_indices = @transform_0, window_bounds = array<i64: 1, 4, 256>}, {pipeline_mode = #tpu.pipeline_mode<synchronous>, transform_indices = @transform_1, window_bounds = array<i64: 4, 4>}, {transform_indices = @transform_2, window_bounds = array<i64: 1, 4, 256>}]} {
    %c0 = arith.constant 0 : index
    %c0_0 = arith.constant 0 : index
    %c0_1 = arith.constant 0 : index
    %0 = vector.load %arg1[%c0, %c0_0, %c0_1] : memref<1x4x256xf32, #tpu.memory_space<vmem>>, vector<1x4x256xf32>
    %cst = arith.constant dense<0.000000e+00> : vector<1x4xf32>
    %1 = vector.multi_reduction <add>, %0, %cst [2] : vector<1x4x256xf32> to vector<1x4xf32>
    %c0_2 = arith.constant 0 : index
    %c0_3 = arith.constant 0 : index
    %2 = vector.load %arg2[%c0_2, %c0_3] : memref<4x4xf32, #tpu.memory_space<vmem>>, vector<4x4xf32>
    %cst_4 = arith.constant dense<0.000000e+00> : vector<1x4xf32>
    %3 = tpu.matmul %1, %2, %cst_4 {dimension_numbers = #tpu.dot_dimension_numbers<[1], [0], [0], [1], [0, 0, 1, 1], [], []>} : vector<1x4xf32>, vector<4x4xf32>, vector<1x4xf32> -> vector<1x4xf32>
    %4 = arith.negf %3 : vector<1x4xf32>
    %5 = math.exp %4 : vector<1x4xf32>
    %cst_5 = arith.constant 1.000000e+00 : f32
    %6 = vector.broadcast %cst_5 : f32 to vector<1x4xf32>
    %7 = arith.addf %6, %5 : vector<1x4xf32>
    %8 = arith.divf %6, %7 : vector<1x4xf32>
    %c0_6 = arith.constant 0 : index
    %c0_7 = arith.constant 0 : index
    %c0_8 = arith.constant 0 : index
    %9 = vector.load %arg1[%c0_6, %c0_7, %c0_8] : memref<1x4x256xf32, #tpu.memory_space<vmem>>, vector<1x4x256xf32>
    %10 = vector.shape_cast %8 : vector<1x4xf32> to vector<1x4x1xf32>
    %11 = vector.broadcast %10 : vector<1x4x1xf32> to vector<1x4x256xf32>
    %12 = arith.mulf %9, %11 : vector<1x4x256xf32>
    %c0_9 = arith.constant 0 : index
    %c0_10 = arith.constant 0 : index
    %c0_11 = arith.constant 0 : index
    %13 = vector.load %arg3[%c0_9, %c0_10, %c0_11] : memref<1x4x256xf32, #tpu.memory_space<vmem>>, vector<1x4x256xf32>
    tpu.vector_store %arg3[%c0_9, %c0_10, %c0_11], %12 {strides = array<i32>} : memref<1x4x256xf32, #tpu.memory_space<vmem>>, vector<1x4x256xf32>,
    return
  }
  func.func @transform_0(%arg0: i32) -> (i32, i32, i32) {
    %c0_i32 = arith.constant 0 : i32
    %c0_i32_0 = arith.constant 0 : i32
    %c0_i32_1 = arith.constant 0 : i32
    return %arg0, %c0_i32, %c0_i32_0 : i32, i32, i32
  }
  func.func @transform_1(%arg0: i32) -> (i32, i32) {
    %c0_i32 = arith.constant 0 : i32
    %c0_i32_0 = arith.constant 0 : i32
    %c0_i32_1 = arith.constant 0 : i32
    return %c0_i32, %c0_i32_0 : i32, i32
  }
  func.func @transform_2(%arg0: i32) -> (i32, i32, i32) {
    %c0_i32 = arith.constant 0 : i32
    %c0_i32_0 = arith.constant 0 : i32
    %c0_i32_1 = arith.constant 0 : i32
    return %arg0, %c0_i32, %c0_i32_0 : i32, i32, i32
  }
}

</mosaic_0001>

<llo_original>
// kernel: tpu_custom_call.1
$region0: #{tpu_custom_call.1}
  #allocation0 [shape = 'u32[]', space=smem, size = 0x4, offset = 0x4, fixed_abs, tag = 'smem constant byte address 0x4 - core index']
  #allocation1 [shape = 'u32[144,128]{1,0:T(1,128)}', space=vmem, size = 0x12000, scoped, tag = 'internal scratch']
  %s0 = inlined_call_operand.hbm [shape: f32[2,4,256], index: 0, kind: input, shape index: {}]
  %s1 = inlined_call_operand.hbm [shape: f32[4,4], index: 1, kind: input, shape index: {}]
  %s2 = inlined_call_operand.hbm [shape: f32[2,4,256], index: 2, kind: output, shape index: {}]
  %s3 = sld [smem:[#allocation0]]
  $region49: #{tpu_custom_call.1} parent=0
    _
  %s5 = ssub.s32 1, %s3
  %s6 = scalar_select 0, %s5, %s3
  $region1: #{tpu_custom_call.1} parent=0
    #allocation2 [shape = 'u8[8192]{0}', space=vmem, size = 0x2000, scoped, tag = 'input window, operand 0']
    #allocation3 [shape = 's32[2]{0}', space=sflag, size = 0x8, scoped, tag = 'scoped memory for tpu_custom_call.1']
    #allocation4 [shape = 's32[2]{0}', space=sflag, size = 0x8, scoped, tag = 'scoped memory for tpu_custom_call.1']
    #allocation5 [shape = 'u8[2048]{0}', space=vmem, size = 0x800, scoped, tag = 'input window, operand 1, single buffered']
    #allocation6 [shape = 's32[1]{0}', space=sflag, size = 0x4, scoped, tag = 'scoped memory for tpu_custom_call.1']
    #allocation7 [shape = 'u8[8192]{0}', space=vmem, size = 0x2000, scoped, tag = 'output window, operand 0']
    %7 = vsyncpa [#allocation3], 0
    %s8 = scalar_lea.sflag [#allocation3], 1
    %9 = vsyncpa %s8, 0
    %10 = vsyncpa [#allocation6], 0
    %11 = vsyncpa [#allocation4], 0
    %s12 = scalar_lea.sflag [#allocation4], 1
    %13 = vsyncpa %s12, 0
    loop: start=0, step=1, limit=4
    $region2: #{tpu_custom_call.1} parent=1 // loop_pre_header
      _
    $region3: #{tpu_custom_call.1} parent=1 // loop_header
      %s15 = sphi 0, %s19
      %p16 = scmp.ge.s32.totalorder %s15, 4
      %s25 = sphi 0, %s27
      %s28 = sphi 0, %s25
      %s29 = sphi 0, %s28
      %s45 = sphi 0, %s29
      %s49 = sphi 0, %s49
      %s51 = sphi 0, %s49
      %s52 = sphi 0, %s51
      %s66 = sphi 0, %s52
      %s72 = sphi 0, %s74
      %s75 = sphi 0, %s72
      %s76 = sphi 0, %s75
      %s92 = sphi 0, %s76
    $region4: #{tpu_custom_call.1} parent=1 // loop_header_branch
      %18 = sbr.rel (%p16) target = $region8
    $region5: #{tpu_custom_call.1} parent=1 // loop_body
      %s20 = ssub.s32 %s15, 1
      %s21 = ssub.s32 %s15, 2
      %s22 = sadd.s32 %s15, 1
      %s23 = ssub.s32 %s15, %s22
      %p24 = scmp.eq.s32.totalorder %s23, 0
      %s26 = sadd.s32 %s25, 1
      %s27 = scalar_select %p24, %s25, %s26
      %p30 = pneg %p24
      %p31 = scmp.eq.s32.totalorder %s15, 1
      %p32 = por %p30, %p31
      %p33 = scmp.ne.s32.totalorder %s25, %s28
      %p34 = scmp.eq.s32.totalorder %s15, 0
      %p35 = por %p33, %p34
      %p36 = scmp.ne.s32.totalorder %s25, %s28
      %p37 = scmp.eq.s32.totalorder %s20, 1
      %p38 = por %p36, %p37
      %p39 = scmp.ne.s32.totalorder %s28, %s29
      %p40 = scmp.eq.s32.totalorder %s20, 0
      %p41 = por %p39, %p40
      %p42 = scmp.ne.s32.totalorder %s28, %s29
      %p43 = scmp.eq.s32.totalorder %s21, 1
      %p44 = por %p42, %p43
      %p46 = scmp.ne.s32.totalorder %s29, %s45
      %p47 = scmp.eq.s32.totalorder %s21, 0
      %p48 = por %p46, %p47
      %s50 = sadd.s32 %s49, 1
      %p53 = scmp.eq.s32.totalorder %s15, 1
      %p54 = scmp.ne.s32.totalorder %s49, %s51
      %p55 = scmp.eq.s32.totalorder %s15, 0
      %p56 = por %p54, %p55
      %p57 = scmp.ne.s32.totalorder %s49, %s51
      %p58 = scmp.eq.s32.totalorder %s20, 1
      %p59 = por %p57, %p58
      %p60 = scmp.ne.s32.totalorder %s51, %s52
      %p61 = scmp.eq.s32.totalorder %s20, 0
      %p62 = por %p60, %p61
      %p63 = scmp.ne.s32.totalorder %s51, %s52
      %p64 = scmp.eq.s32.totalorder %s21, 1
      %p65 = por %p63, %p64
      %p67 = scmp.ne.s32.totalorder %s52, %s66
      %p68 = scmp.eq.s32.totalorder %s21, 0
      %p69 = por %p67, %p68
      %s70 = ssub.s32 %s15, %s22
      %p71 = scmp.eq.s32.totalorder %s70, 0
      %s73 = sadd.s32 %s72, 1
      %s74 = scalar_select %p71, %s72, %s73
      %p77 = pneg %p71
      %p78 = scmp.eq.s32.totalorder %s15, 1
      %p79 = por %p77, %p78
      %p80 = scmp.ne.s32.totalorder %s72, %s75
      %p81 = scmp.eq.s32.totalorder %s15, 0
      %p82 = por %p80, %p81
      %p83 = scmp.ne.s32.totalorder %s72, %s75
      %p84 = scmp.eq.s32.totalorder %s20, 1
      %p85 = por %p83, %p84
      %p86 = scmp.ne.s32.totalorder %s75, %s76
      %p87 = scmp.eq.s32.totalorder %s20, 0
      %p88 = por %p86, %p87
      %p89 = scmp.ne.s32.totalorder %s75, %s76
      %p90 = scmp.eq.s32.totalorder %s21, 1
      %p91 = por %p89, %p90
      %p93 = scmp.ne.s32.totalorder %s76, %s92
      %p94 = scmp.eq.s32.totalorder %s21, 0
      %p95 = por %p93, %p94
      %p96 = scmp.le.s32.totalorder 1, %s15
      %p97 = scmp.lt.s32.totalorder %s15, 3
      %p98 = pnand %p96, %p97
      %p99 = pneg %p98
      // Predicated region
      $region9: #{tpu_custom_call.1} parent=5 // pred_check
        _
      $region10: #{tpu_custom_call.1} parent=5 // pred_check_branch
        %101 = sbr.rel (%p98) target = $region12
      $region11: #{tpu_custom_call.1} parent=5 // pred_region
        %s102 = ssub.s32 %s15, 1
        // Predicated region
        $region13: #{tpu_custom_call.1} parent=11 // pred_check
          %p103 = pneg %p62
        $region14: #{tpu_custom_call.1} parent=11 // pred_check_branch
          %105 = sbr.rel (%p103) target = $region16
        $region15: #{tpu_custom_call.1} parent=11 // pred_region
          %s107 = ssub.s32 64, 64
          %108 = vsyncadd [#allocation6], %s107
          %s110 = sshll.u32 [#allocation5], 4
          %s111 = int_to_ptr.vmem [resolvable:$true] %s110
          %113 = dma.hbm_to_vmem [thread:$0]  %s1, 64, %s111, [#allocation6]
        $region16: #{tpu_custom_call.1} parent=11 // pred_fallthru
          _
      $region12: #{tpu_custom_call.1} parent=5 // pred_fallthru
        _
      %p114 = scmp.lt.s32.totalorder %s15, 2
      // Predicated region
      $region17: #{tpu_custom_call.1} parent=5 // pred_check
        %p115 = pneg %p114
      $region18: #{tpu_custom_call.1} parent=5 // pred_check_branch
        %117 = sbr.rel (%p115) target = $region20
      $region19: #{tpu_custom_call.1} parent=5 // pred_region
        // Predicated region
        $region21: #{tpu_custom_call.1} parent=19 // pred_check
          %p118 = pneg %p35
        $region22: #{tpu_custom_call.1} parent=19 // pred_check_branch
          %120 = sbr.rel (%p118) target = $region24
        $region23: #{tpu_custom_call.1} parent=19 // pred_region
          %s121 = sand.u32 %s25, 1
          %s122 = scalar_lea.sflag [#allocation3], %s121
          %s123 = sand.u32 %s25, 1
          %s124 = smul.addr %s123, 8
          %s125 = scalar_lea.vmem [#allocation2], %s124
          %s127 = ssub.s32 128, 128
          %128 = vsyncadd %s122, %s127
          %s129 = smul.addr %s15, 2
          %s130 = smul.addr %s129, 64
          %s131 = scalar_lea.hbm %s0, %s130
          %s133 = sshll.u32 %s125, 4
          %s134 = int_to_ptr.vmem [resolvable:$true] %s133
          %136 = dma.hbm_to_vmem [thread:$0]  %s131, 128, %s134, %s122
        $region24: #{tpu_custom_call.1} parent=19 // pred_fallthru
          _
      $region20: #{tpu_custom_call.1} parent=5 // pred_fallthru
        _
      %p137 = scmp.le.s32.totalorder 1, %s15
      %p138 = scmp.lt.s32.totalorder %s15, 3
      %p139 = pnand %p137, %p138
      %p140 = pneg %p139
      // Predicated region
      $region25: #{tpu_custom_call.1} parent=5 // pred_check
        _
      $region26: #{tpu_custom_call.1} parent=5 // pred_check_branch
        %142 = sbr.rel (%p139) target = $region28
      $region27: #{tpu_custom_call.1} parent=5 // pred_region
        %s143 = ssub.s32 %s15, 1
        %s144 = sand.u32 %s28, 1
        %s145 = scalar_lea.sflag [#allocation3], %s144
        %s146 = sand.u32 %s28, 1
        %s147 = smul.addr %s146, 8
        %s148 = scalar_lea.vmem [#allocation2], %s147
        // Predicated region
        $region29: #{tpu_custom_call.1} parent=27 // pred_check
          %p149 = pneg %p41
        $region30: #{tpu_custom_call.1} parent=27 // pred_check_branch
          %151 = sbr.rel (%p149) target = $region32
        $region31: #{tpu_custom_call.1} parent=27 // pred_region
          %152 = dma.done %s145, 128
        $region32: #{tpu_custom_call.1} parent=27 // pred_fallthru
          _
        // Predicated region
        $region33: #{tpu_custom_call.1} parent=27 // pred_check
          %p153 = pneg %p62
        $region34: #{tpu_custom_call.1} parent=27 // pred_check_branch
          %155 = sbr.rel (%p153) target = $region36
        $region35: #{tpu_custom_call.1} parent=27 // pred_region
          %156 = dma.done [#allocation6], 64
        $region36: #{tpu_custom_call.1} parent=27 // pred_fallthru
          _
        %s157 = sand.u32 %s28, 1
        %s158 = scalar_lea.sflag [#allocation3], %s157
        %s159 = sand.u32 %s28, 1
        %s160 = smul.addr %s159, 8
        %s161 = scalar_lea.vmem [#allocation2], %s160
        %p162 = pneg %p41
        %p163 = pneg %p38
        %p164 = pneg %p62
        %p165 = pneg %p59
        %p166 = pneg %p88
        %p167 = pneg %p85
        %s168 = sand.u32 %s75, 1
        %s169 = scalar_lea.sflag [#allocation4], %s168
        %s170 = sand.u32 %s75, 1
        %s171 = smul.addr %s170, 8
        %s172 = scalar_lea.vmem [#allocation7], %s171
        %v173 = vld [vmem:[%s148] sm:$0xff]
        %v175 = vcombine.high %v173, %v173
        %vm177 = vcmask 1043456
        %v178 = vsel %vm177, %v173, 0.0
        %v179 = vsel %vm177, %v175, 0.0
        %v180 = vadd.f32 %v178, %v179
        %181 = vadd.xlane.f32.xlu0 %v180
        %v182 = vpop.xlane.xlu0 %181
        %v183 = vld [vmem:[#allocation5] sm:$0xf]
        %v185 = vlaneseq
        %v186 = vand.u32 %v185, 127
        %v187 = vlaneseq
        %v188 = vshrl.u32 %v187, 7
        %v189 = vsub.s32 %v186, %v188
        %v190 = vrot.slane %v182, %v189
        %vm191 = vcmask 31744
        %v192 = vsel %vm191, %v190, 0
        %v195 = vsel %vm177, %v183, 0
        %197 = vmatprep.subr.mxu0 0.0
        %198 = vmatpush1.msra.mxu0 %v195
        %199 = vmatprep.subr.mxu0 0.0
        %200 = vmatpush1.msra.mxu0 0.0
        %201 = vmatprep.subr.mxu0 0.0
        %202 = vmatpush1.msra.mxu0 0.0
        %203 = vmatprep.subr.mxu0 0.0
        %204 = vmatpush1.msra.mxu0 0.0
        %205 = vmatprep.subr.mxu0 0.0
        %206 = vmatpush1.msra.mxu0 0.0
        %207 = vmatprep.subr.mxu0 0.0
        %208 = vmatpush1.msra.mxu0 0.0
        %209 = vmatprep.subr.mxu0 0.0
        %210 = vmatpush1.msra.mxu0 0.0
        %211 = vmatprep.subr.mxu0 0.0
        %212 = vmatpush1.msra.mxu0 0.0
        %213 = vmatprep.subr.mxu0 0.0
        %214 = vmatpush1.msra.mxu0 0.0
        %215 = vmatprep.subr.mxu0 0.0
        %216 = vmatpush1.msra.mxu0 0.0
        %217 = vmatprep.subr.mxu0 0.0
        %218 = vmatpush1.msra.mxu0 0.0
        %219 = vmatprep.subr.mxu0 0.0
        %220 = vmatpush1.msra.mxu0 0.0
        %221 = vmatprep.subr.mxu0 0.0
        %222 = vmatpush1.msra.mxu0 0.0
        %223 = vmatprep.subr.mxu0 0.0
        %224 = vmatpush1.msra.mxu0 0.0
        %225 = vmatprep.subr.mxu0 0.0
        %226 = vmatpush1.msra.mxu0 0.0
        %227 = vmatprep.subr.mxu0 0.0
        %228 = vmatpush1.msra.mxu0 0.0
        %229 = vmatprep.subr.mxu0 0.0
        %230 = vmatpush1.msra.mxu0 0.0
        %231 = vmatprep.subr.mxu0 0.0
        %232 = vmatpush1.msra.mxu0 0.0
        %233 = vmatprep.subr.mxu0 0.0
        %234 = vmatpush1.msra.mxu0 0.0
        %235 = vmatprep.subr.mxu0 0.0
        %236 = vmatpush1.msra.mxu0 0.0
        %237 = vmatprep.subr.mxu0 0.0
        %238 = vmatpush1.msra.mxu0 0.0
        %239 = vmatprep.subr.mxu0 0.0
        %240 = vmatpush1.msra.mxu0 0.0
        %241 = vmatprep.subr.mxu0 0.0
        %242 = vmatpush1.msra.mxu0 0.0
        %243 = vmatprep.subr.mxu0 0.0
        %244 = vmatpush1.msra.mxu0 0.0
        %245 = vmatprep.subr.mxu0 0.0
        %246 = vmatpush1.msra.mxu0 0.0
        %247 = vmatprep.subr.mxu0 0.0
        %248 = vmatpush1.msra.mxu0 0.0
        %249 = vmatprep.subr.mxu0 0.0
        %250 = vmatpush1.msra.mxu0 0.0
        %251 = vmatprep.subr.mxu0 0.0
        %252 = vmatpush1.msra.mxu0 0.0
        %253 = vmatprep.subr.mxu0 0.0
        %254 = vmatpush1.msra.mxu0 0.0
        %255 = vmatprep.subr.mxu0 0.0
        %256 = vmatpush1.msra.mxu0 0.0
        %257 = vmatprep.subr.mxu0 0.0
        %258 = vmatpush1.msra.mxu0 0.0
        %259 = vmatprep.subr.mxu0 0.0
        %260 = vmatpush1.msra.mxu0 0.0
        %261 = vmatprep.mubr.f32.mxu0 0.0
        %262 = vmatmul.mubr.f32.gmra.mrb[0].mxu0 %v192
        %v263 = vpop.f32.mrb[0].mxu0
        %v264 = vadd.f32 0.0, %v263
        %v265 = vpop.f32.mrb[0].mxu0
        %266 = vdwg.mxu0
        %v267 = vxor.u32 %v264, 2147483648
        %v268 = vmul.f32 %v267, 1.442695
        %v269 = vpow.pop %v268
        %v270 = vadd.f32 %v269, 1.0
        %v271 = vrcp.pop %v270
        %v272 = vmul.f32 1.0, %v271
        %v273 = vlaneseq
        %v274 = vshrl.u32 %v273, 7
        %v275 = vsub.s32 0, %v274
        %v276 = vrot.slane %v272, %v275
        %278 = vbcast.lane.b32.xlu0 %v276, 256
        %v279 = vpop.permute.xlu0 %278
        %v282 = vunpack.c.l.s4 839922192
        %v283 = vunpack.c.0.s8 %v282
        %v284 = vlaneseq
        %v285 = vshrl.u32 %v284, 7
        %v286 = vsub.s32 %v283, %v285
        %v287 = vrot.slane %v279, %v286
        %v289 = vmul.f32 %v173, %v287
        %290 = vst [vmem:[%s172] sm:$0xff] %v289
        %s291 = sand.u32 %s75, 1
        %s292 = scalar_lea.sflag [#allocation4], %s291
        %s293 = sand.u32 %s75, 1
        %s294 = smul.addr %s293, 8
        %s295 = scalar_lea.vmem [#allocation7], %s294
        // Predicated region
        $region37: #{tpu_custom_call.1} parent=27 // pred_check
          %p296 = pneg %p85
        $region38: #{tpu_custom_call.1} parent=27 // pred_check_branch
          %298 = sbr.rel (%p296) target = $region40
        $region39: #{tpu_custom_call.1} parent=27 // pred_region
          %s300 = ssub.s32 128, 128
          %301 = vsyncadd %s292, %s300
          %s302 = smul.addr %s20, 2
          %s303 = smul.addr %s302, 64
          %s304 = scalar_lea.hbm %s2, %s303
          %s306 = sshll.u32 %s295, 4
          %s307 = int_to_ptr.vmem [resolvable:$true] %s306
          %309 = dma.vmem_to_hbm [thread:$0]  %s307, 128, %s304, %s292
        $region40: #{tpu_custom_call.1} parent=27 // pred_fallthru
          _
      $region28: #{tpu_custom_call.1} parent=5 // pred_fallthru
        _
      %p310 = scmp.le.s32.totalorder 2, %s15
      // Predicated region
      $region41: #{tpu_custom_call.1} parent=5 // pred_check
        %p311 = pneg %p310
      $region42: #{tpu_custom_call.1} parent=5 // pred_check_branch
        %313 = sbr.rel (%p311) target = $region44
      $region43: #{tpu_custom_call.1} parent=5 // pred_region
        %s314 = ssub.s32 %s15, 2
        // Predicated region
        $region45: #{tpu_custom_call.1} parent=43 // pred_check
          %p315 = pneg %p91
        $region46: #{tpu_custom_call.1} parent=43 // pred_check_branch
          %317 = sbr.rel (%p315) target = $region48
        $region47: #{tpu_custom_call.1} parent=43 // pred_region
          %s318 = sand.u32 %s76, 1
          %s319 = scalar_lea.sflag [#allocation4], %s318
          %s320 = sand.u32 %s76, 1
          %s321 = smul.addr %s320, 8
          %s322 = scalar_lea.vmem [#allocation7], %s321
          %323 = dma.done %s319, 128
        $region48: #{tpu_custom_call.1} parent=43 // pred_fallthru
          _
      $region44: #{tpu_custom_call.1} parent=5 // pred_fallthru
        _
    $region6: #{tpu_custom_call.1} parent=1 // loop_footer
      %s19 = sadd.s32 1, %s15
    $region7: #{tpu_custom_call.1} parent=1 // loop_footer_branch
      %14 = sbr.rel target = $region3
    $region8: #{tpu_custom_call.1} parent=1 // loop_exit
      _
    %324 = vsyncpa [#allocation3], 1
    %s325 = scalar_lea.sflag [#allocation3], 1
    %326 = vsyncpa %s325, 1
    %327 = vsyncpa [#allocation6], 1
    %328 = vsyncpa [#allocation4], 1
    %s329 = scalar_lea.sflag [#allocation4], 1
    %330 = vsyncpa %s329, 1

// kernel: tpu_custom_call.1
$region0: #{tpu_custom_call.1}
  #allocation0 [shape = 'u32[]', space=smem, size = 0x4, offset = 0x4, fixed_abs, tag = 'smem constant byte address 0x4 - core index']
  #allocation1 [shape = 'u32[144,128]{1,0:T(1,128)}', space=vmem, size = 0x12000, scoped, tag = 'internal scratch']
  %s0 = inlined_call_operand.hbm [shape: f32[2,4,256], index: 0, kind: input, shape index: {}]
  %s1 = inlined_call_operand.hbm [shape: f32[4,4], index: 1, kind: input, shape index: {}]
  %s2 = inlined_call_operand.hbm [shape: f32[2,4,256], index: 2, kind: output, shape index: {}]
  %s3 = sld [smem:[#allocation0]]
  $region49: #{tpu_custom_call.1} parent=0
    _
  %s5 = ssub.s32 1, %s3
  %s6 = scalar_select 0, %s5, %s3
  $region1: #{tpu_custom_call.1} parent=0
    #allocation2 [shape = 'u8[8192]{0}', space=vmem, size = 0x2000, scoped, tag = 'input window, operand 0']
    #allocation3 [shape = 's32[2]{0}', space=sflag, size = 0x8, scoped, tag = 'scoped memory for tpu_custom_call.1']
    #allocation4 [shape = 's32[2]{0}', space=sflag, size = 0x8, scoped, tag = 'scoped memory for tpu_custom_call.1']
    #allocation5 [shape = 'u8[2048]{0}', space=vmem, size = 0x800, scoped, tag = 'input window, operand 1, single buffered']
    #allocation6 [shape = 's32[1]{0}', space=sflag, size = 0x4, scoped, tag = 'scoped memory for tpu_custom_call.1']
    #allocation7 [shape = 'u8[8192]{0}', space=vmem, size = 0x2000, scoped, tag = 'output window, operand 0']
    %7 = vsyncpa [#allocation3], 0
    %s8 = scalar_lea.sflag [#allocation3], 1
    %9 = vsyncpa %s8, 0
    %10 = vsyncpa [#allocation6], 0
    %11 = vsyncpa [#allocation4], 0
    %s12 = scalar_lea.sflag [#allocation4], 1
    %13 = vsyncpa %s12, 0
    loop: start=0, step=1, limit=4
    $region2: #{tpu_custom_call.1} parent=1 // loop_pre_header
      _
    $region3: #{tpu_custom_call.1} parent=1 // loop_header
      %s15 = sphi 0, %s19
      %p16 = scmp.ge.s32.totalorder %s15, 4
      %s25 = sphi 0, %s27
      %s28 = sphi 0, %s25
      %s29 = sphi 0, %s28
      %s45 = sphi 0, %s29
      %s49 = sphi 0, %s49
      %s51 = sphi 0, %s49
      %s52 = sphi 0, %s51
      %s66 = sphi 0, %s52
      %s72 = sphi 0, %s74
      %s75 = sphi 0, %s72
      %s76 = sphi 0, %s75
      %s92 = sphi 0, %s76
    $region4: #{tpu_custom_call.1} parent=1 // loop_header_branch
      %18 = sbr.rel (%p16) target = $region8
    $region5: #{tpu_custom_call.1} parent=1 // loop_body
      %s20 = ssub.s32 %s15, 1
      %s21 = ssub.s32 %s15, 2
      %s22 = sadd.s32 %s15, 1
      %s23 = ssub.s32 %s15, %s22
      %p24 = scmp.eq.s32.totalorder %s23, 0
      %s26 = sadd.s32 %s25, 1
      %s27 = scalar_select %p24, %s25, %s26
      %p30 = pneg %p24
      %p31 = scmp.eq.s32.totalorder %s15, 1
      %p32 = por %p30, %p31
      %p33 = scmp.ne.s32.totalorder %s25, %s28
      %p34 = scmp.eq.s32.totalorder %s15, 0
      %p35 = por %p33, %p34
      %p36 = scmp.ne.s32.totalorder %s25, %s28
      %p37 = scmp.eq.s32.totalorder %s20, 1
      %p38 = por %p36, %p37
      %p39 = scmp.ne.s32.totalorder %s28, %s29
      %p40 = scmp.eq.s32.totalorder %s20, 0
      %p41 = por %p39, %p40
      %p42 = scmp.ne.s32.totalorder %s28, %s29
      %p43 = scmp.eq.s32.totalorder %s21, 1
      %p44 = por %p42, %p43
      %p46 = scmp.ne.s32.totalorder %s29, %s45
      %p47 = scmp.eq.s32.totalorder %s21, 0
      %p48 = por %p46, %p47
      %s50 = sadd.s32 %s49, 1
      %p53 = scmp.eq.s32.totalorder %s15, 1
      %p54 = scmp.ne.s32.totalorder %s49, %s51
      %p55 = scmp.eq.s32.totalorder %s15, 0
      %p56 = por %p54, %p55
      %p57 = scmp.ne.s32.totalorder %s49, %s51
      %p58 = scmp.eq.s32.totalorder %s20, 1
      %p59 = por %p57, %p58
      %p60 = scmp.ne.s32.totalorder %s51, %s52
      %p61 = scmp.eq.s32.totalorder %s20, 0
      %p62 = por %p60, %p61
      %p63 = scmp.ne.s32.totalorder %s51, %s52
      %p64 = scmp.eq.s32.totalorder %s21, 1
      %p65 = por %p63, %p64
      %p67 = scmp.ne.s32.totalorder %s52, %s66
      %p68 = scmp.eq.s32.totalorder %s21, 0
      %p69 = por %p67, %p68
      %s70 = ssub.s32 %s15, %s22
      %p71 = scmp.eq.s32.totalorder %s70, 0
      %s73 = sadd.s32 %s72, 1
      %s74 = scalar_select %p71, %s72, %s73
      %p77 = pneg %p71
      %p78 = scmp.eq.s32.totalorder %s15, 1
      %p79 = por %p77, %p78
      %p80 = scmp.ne.s32.totalorder %s72, %s75
      %p81 = scmp.eq.s32.totalorder %s15, 0
      %p82 = por %p80, %p81
      %p83 = scmp.ne.s32.totalorder %s72, %s75
      %p84 = scmp.eq.s32.totalorder %s20, 1
      %p85 = por %p83, %p84
      %p86 = scmp.ne.s32.totalorder %s75, %s76
      %p87 = scmp.eq.s32.totalorder %s20, 0
      %p88 = por %p86, %p87
      %p89 = scmp.ne.s32.totalorder %s75, %s76
      %p90 = scmp.eq.s32.totalorder %s21, 1
      %p91 = por %p89, %p90
      %p93 = scmp.ne.s32.totalorder %s76, %s92
      %p94 = scmp.eq.s32.totalorder %s21, 0
      %p95 = por %p93, %p94
      %p96 = scmp.le.s32.totalorder 1, %s15
      %p97 = scmp.lt.s32.totalorder %s15, 3
      %p98 = pnand %p96, %p97
      %p99 = pneg %p98
      // Predicated region
      $region9: #{tpu_custom_call.1} parent=5 // pred_check
        _
      $region10: #{tpu_custom_call.1} parent=5 // pred_check_branch
        %101 = sbr.rel (%p98) target = $region12
      $region11: #{tpu_custom_call.1} parent=5 // pred_region
        %s102 = ssub.s32 %s15, 1
        // Predicated region
        $region13: #{tpu_custom_call.1} parent=11 // pred_check
          %p103 = pneg %p62
        $region14: #{tpu_custom_call.1} parent=11 // pred_check_branch
          %105 = sbr.rel (%p103) target = $region16
        $region15: #{tpu_custom_call.1} parent=11 // pred_region
          %s107 = ssub.s32 64, 64
          %108 = vsyncadd [#allocation6], %s107
          %s110 = sshll.u32 [#allocation5], 4
          %s111 = int_to_ptr.vmem [resolvable:$true] %s110
          %113 = dma.hbm_to_vmem [thread:$0]  %s1, 64, %s111, [#allocation6]
        $region16: #{tpu_custom_call.1} parent=11 // pred_fallthru
          _
      $region12: #{tpu_custom_call.1} parent=5 // pred_fallthru
        _
      %p114 = scmp.lt.s32.totalorder %s15, 2
      // Predicated region
      $region17: #{tpu_custom_call.1} parent=5 // pred_check
        %p115 = pneg %p114
      $region18: #{tpu_custom_call.1} parent=5 // pred_check_branch
        %117 = sbr.rel (%p115) target = $region20
      $region19: #{tpu_custom_call.1} parent=5 // pred_region
        // Predicated region
        $region21: #{tpu_custom_call.1} parent=19 // pred_check
          %p118 = pneg %p35
        $region22: #{tpu_custom_call.1} parent=19 // pred_check_branch
          %120 = sbr.rel (%p118) target = $region24
        $region23: #{tpu_custom_call.1} parent=19 // pred_region
          %s121 = sand.u32 %s25, 1
          %s122 = scalar_lea.sflag [#allocation3], %s121
          %s123 = sand.u32 %s25, 1
          %s124 = smul.addr %s123, 8
          %s125 = scalar_lea.vmem [#allocation2], %s124
          %s127 = ssub.s32 128, 128
          %128 = vsyncadd %s122, %s127
          %s129 = smul.addr %s15, 2
          %s130 = smul.addr %s129, 64
          %s131 = scalar_lea.hbm %s0, %s130
          %s133 = sshll.u32 %s125, 4
          %s134 = int_to_ptr.vmem [resolvable:$true] %s133
          %136 = dma.hbm_to_vmem [thread:$0]  %s131, 128, %s134, %s122
        $region24: #{tpu_custom_call.1} parent=19 // pred_fallthru
          _
      $region20: #{tpu_custom_call.1} parent=5 // pred_fallthru
        _
      %p137 = scmp.le.s32.totalorder 1, %s15
      %p138 = scmp.lt.s32.totalorder %s15, 3
      %p139 = pnand %p137, %p138
      %p140 = pneg %p139
      // Predicated region
      $region25: #{tpu_custom_call.1} parent=5 // pred_check
        _
      $region26: #{tpu_custom_call.1} parent=5 // pred_check_branch
        %142 = sbr.rel (%p139) target = $region28
      $region27: #{tpu_custom_call.1} parent=5 // pred_region
        %s143 = ssub.s32 %s15, 1
        %s144 = sand.u32 %s28, 1
        %s145 = scalar_lea.sflag [#allocation3], %s144
        %s146 = sand.u32 %s28, 1
        %s147 = smul.addr %s146, 8
        %s148 = scalar_lea.vmem [#allocation2], %s147
        // Predicated region
        $region29: #{tpu_custom_call.1} parent=27 // pred_check
          %p149 = pneg %p41
        $region30: #{tpu_custom_call.1} parent=27 // pred_check_branch
          %151 = sbr.rel (%p149) target = $region32
        $region31: #{tpu_custom_call.1} parent=27 // pred_region
          %152 = dma.done %s145, 128
        $region32: #{tpu_custom_call.1} parent=27 // pred_fallthru
          _
        // Predicated region
        $region33: #{tpu_custom_call.1} parent=27 // pred_check
          %p153 = pneg %p62
        $region34: #{tpu_custom_call.1} parent=27 // pred_check_branch
          %155 = sbr.rel (%p153) target = $region36
        $region35: #{tpu_custom_call.1} parent=27 // pred_region
          %156 = dma.done [#allocation6], 64
        $region36: #{tpu_custom_call.1} parent=27 // pred_fallthru
          _
        %s157 = sand.u32 %s28, 1
        %s158 = scalar_lea.sflag [#allocation3], %s157
        %s159 = sand.u32 %s28, 1
        %s160 = smul.addr %s159, 8
        %s161 = scalar_lea.vmem [#allocation2], %s160
        %p162 = pneg %p41
        %p163 = pneg %p38
        %p164 = pneg %p62
        %p165 = pneg %p59
        %p166 = pneg %p88
        %p167 = pneg %p85
        %s168 = sand.u32 %s75, 1
        %s169 = scalar_lea.sflag [#allocation4], %s168
        %s170 = sand.u32 %s75, 1
        %s171 = smul.addr %s170, 8
        %s172 = scalar_lea.vmem [#allocation7], %s171
        %v173 = vld [vmem:[%s148] sm:$0xff]
        %v175 = vcombine.high %v173, %v173
        %vm177 = vcmask 1043456
        %v178 = vsel %vm177, %v173, 0.0
        %v179 = vsel %vm177, %v175, 0.0
        %v180 = vadd.f32 %v178, %v179
        %181 = vadd.xlane.f32.xlu0 %v180
        %v182 = vpop.xlane.xlu0 %181
        %v183 = vld [vmem:[#allocation5] sm:$0xf]
        %v185 = vlaneseq
        %v186 = vand.u32 %v185, 127
        %v187 = vlaneseq
        %v188 = vshrl.u32 %v187, 7
        %v189 = vsub.s32 %v186, %v188
        %v190 = vrot.slane %v182, %v189
        %vm191 = vcmask 31744
        %v192 = vsel %vm191, %v190, 0
        %v195 = vsel %vm177, %v183, 0
        %197 = vmatprep.subr.mxu0 0.0
        %198 = vmatpush1.msra.mxu0 %v195
        %199 = vmatprep.subr.mxu0 0.0
        %200 = vmatpush1.msra.mxu0 0.0
        %201 = vmatprep.subr.mxu0 0.0
        %202 = vmatpush1.msra.mxu0 0.0
        %203 = vmatprep.subr.mxu0 0.0
        %204 = vmatpush1.msra.mxu0 0.0
        %205 = vmatprep.subr.mxu0 0.0
        %206 = vmatpush1.msra.mxu0 0.0
        %207 = vmatprep.subr.mxu0 0.0
        %208 = vmatpush1.msra.mxu0 0.0
        %209 = vmatprep.subr.mxu0 0.0
        %210 = vmatpush1.msra.mxu0 0.0
        %211 = vmatprep.subr.mxu0 0.0
        %212 = vmatpush1.msra.mxu0 0.0
        %213 = vmatprep.subr.mxu0 0.0
        %214 = vmatpush1.msra.mxu0 0.0
        %215 = vmatprep.subr.mxu0 0.0
        %216 = vmatpush1.msra.mxu0 0.0
        %217 = vmatprep.subr.mxu0 0.0
        %218 = vmatpush1.msra.mxu0 0.0
        %219 = vmatprep.subr.mxu0 0.0
        %220 = vmatpush1.msra.mxu0 0.0
        %221 = vmatprep.subr.mxu0 0.0
        %222 = vmatpush1.msra.mxu0 0.0
        %223 = vmatprep.subr.mxu0 0.0
        %224 = vmatpush1.msra.mxu0 0.0
        %225 = vmatprep.subr.mxu0 0.0
        %226 = vmatpush1.msra.mxu0 0.0
        %227 = vmatprep.subr.mxu0 0.0
        %228 = vmatpush1.msra.mxu0 0.0
        %229 = vmatprep.subr.mxu0 0.0
        %230 = vmatpush1.msra.mxu0 0.0
        %231 = vmatprep.subr.mxu0 0.0
        %232 = vmatpush1.msra.mxu0 0.0
        %233 = vmatprep.subr.mxu0 0.0
        %234 = vmatpush1.msra.mxu0 0.0
        %235 = vmatprep.subr.mxu0 0.0
        %236 = vmatpush1.msra.mxu0 0.0
        %237 = vmatprep.subr.mxu0 0.0
        %238 = vmatpush1.msra.mxu0 0.0
        %239 = vmatprep.subr.mxu0 0.0
        %240 = vmatpush1.msra.mxu0 0.0
        %241 = vmatprep.subr.mxu0 0.0
        %242 = vmatpush1.msra.mxu0 0.0
        %243 = vmatprep.subr.mxu0 0.0
        %244 = vmatpush1.msra.mxu0 0.0
        %245 = vmatprep.subr.mxu0 0.0
        %246 = vmatpush1.msra.mxu0 0.0
        %247 = vmatprep.subr.mxu0 0.0
        %248 = vmatpush1.msra.mxu0 0.0
        %249 = vmatprep.subr.mxu0 0.0
        %250 = vmatpush1.msra.mxu0 0.0
        %251 = vmatprep.subr.mxu0 0.0
        %252 = vmatpush1.msra.mxu0 0.0
        %253 = vmatprep.subr.mxu0 0.0
        %254 = vmatpush1.msra.mxu0 0.0
        %255 = vmatprep.subr.mxu0 0.0
        %256 = vmatpush1.msra.mxu0 0.0
        %257 = vmatprep.subr.mxu0 0.0
        %258 = vmatpush1.msra.mxu0 0.0
        %259 = vmatprep.subr.mxu0 0.0
        %260 = vmatpush1.msra.mxu0 0.0
        %261 = vmatprep.mubr.f32.mxu0 0.0
        %262 = vmatmul.mubr.f32.gmra.mrb[0].mxu0 %v192
        %v263 = vpop.f32.mrb[0].mxu0
        %v264 = vadd.f32 0.0, %v263
        %v265 = vpop.f32.mrb[0].mxu0
        %266 = vdwg.mxu0
        %v267 = vxor.u32 %v264, 2147483648
        %v268 = vmul.f32 %v267, 1.442695
        %v269 = vpow.pop %v268
        %v270 = vadd.f32 %v269, 1.0
        %v271 = vrcp.pop %v270
        %v272 = vmul.f32 1.0, %v271
        %v273 = vlaneseq
        %v274 = vshrl.u32 %v273, 7
        %v275 = vsub.s32 0, %v274
        %v276 = vrot.slane %v272, %v275
        %278 = vbcast.lane.b32.xlu0 %v276, 256
        %v279 = vpop.permute.xlu0 %278
        %v282 = vunpack.c.l.s4 839922192
        %v283 = vunpack.c.0.s8 %v282
        %v284 = vlaneseq
        %v285 = vshrl.u32 %v284, 7
        %v286 = vsub.s32 %v283, %v285
        %v287 = vrot.slane %v279, %v286
        %v289 = vmul.f32 %v173, %v287
        %290 = vst [vmem:[%s172] sm:$0xff] %v289
        %s291 = sand.u32 %s75, 1
        %s292 = scalar_lea.sflag [#allocation4], %s291
        %s293 = sand.u32 %s75, 1
        %s294 = smul.addr %s293, 8
        %s295 = scalar_lea.vmem [#allocation7], %s294
        // Predicated region
        $region37: #{tpu_custom_call.1} parent=27 // pred_check
          %p296 = pneg %p85
        $region38: #{tpu_custom_call.1} parent=27 // pred_check_branch
          %298 = sbr.rel (%p296) target = $region40
        $region39: #{tpu_custom_call.1} parent=27 // pred_region
          %s300 = ssub.s32 128, 128
          %301 = vsyncadd %s292, %s300
          %s302 = smul.addr %s20, 2
          %s303 = smul.addr %s302, 64
          %s304 = scalar_lea.hbm %s2, %s303
          %s306 = sshll.u32 %s295, 4
          %s307 = int_to_ptr.vmem [resolvable:$true] %s306
          %309 = dma.vmem_to_hbm [thread:$0]  %s307, 128, %s304, %s292
        $region40: #{tpu_custom_call.1} parent=27 // pred_fallthru
          _
      $region28: #{tpu_custom_call.1} parent=5 // pred_fallthru
        _
      %p310 = scmp.le.s32.totalorder 2, %s15
      // Predicated region
      $region41: #{tpu_custom_call.1} parent=5 // pred_check
        %p311 = pneg %p310
      $region42: #{tpu_custom_call.1} parent=5 // pred_check_branch
        %313 = sbr.rel (%p311) target = $region44
      $region43: #{tpu_custom_call.1} parent=5 // pred_region
        %s314 = ssub.s32 %s15, 2
        // Predicated region
        $region45: #{tpu_custom_call.1} parent=43 // pred_check
          %p315 = pneg %p91
        $region46: #{tpu_custom_call.1} parent=43 // pred_check_branch
          %317 = sbr.rel (%p315) target = $region48
        $region47: #{tpu_custom_call.1} parent=43 // pred_region
          %s318 = sand.u32 %s76, 1
          %s319 = scalar_lea.sflag [#allocation4], %s318
          %s320 = sand.u32 %s76, 1
          %s321 = smul.addr %s320, 8
          %s322 = scalar_lea.vmem [#allocation7], %s321
          %323 = dma.done %s319, 128
        $region48: #{tpu_custom_call.1} parent=43 // pred_fallthru
          _
      $region44: #{tpu_custom_call.1} parent=5 // pred_fallthru
        _
    $region6: #{tpu_custom_call.1} parent=1 // loop_footer
      %s19 = sadd.s32 1, %s15
    $region7: #{tpu_custom_call.1} parent=1 // loop_footer_branch
      %14 = sbr.rel target = $region3
    $region8: #{tpu_custom_call.1} parent=1 // loop_exit
      _
    %324 = vsyncpa [#allocation3], 1
    %s325 = scalar_lea.sflag [#allocation3], 1
    %326 = vsyncpa %s325, 1
    %327 = vsyncpa [#allocation6], 1
    %328 = vsyncpa [#allocation4], 1
    %s329 = scalar_lea.sflag [#allocation4], 1
    %330 = vsyncpa %s329, 1

</llo_original>
